<compile_context>
chip_gen: v7x
topology: tpu7x:2x2x1
jax: 0.10.0
libtpu: 0.0.40
codegen_flags: <defaults>
</compile_context>

<pallas_src>
import functools

import jax
import jax.numpy as jnp
from jax.experimental import pallas as pl
from jax.experimental.pallas import tpu as pltpu

_NEG_BIG = -1e30   # padded-logit bias (exp underflows to exactly 0 in f32)
_PAD_N = 128       # lane-dense padded width for the 4-class output


def _emotion_kernel(x_ref, w1_ref, b1_ref, w2_ref, b2_ref, w3_ref, b3_ref,
                    o_ref):
    # fc1 + ReLU  (bf16 MXU inputs, f32 accumulate, f32 elementwise)
    h1 = jnp.dot(x_ref[...].astype(jnp.bfloat16), w1_ref[...],
                 preferred_element_type=jnp.float32)
    h1 = jnp.maximum(h1 + b1_ref[...], 0.0)

    # dropout(p=0.4) -> identity (eval mode)

    # fc2 + ReLU
    h2 = jnp.dot(h1.astype(jnp.bfloat16), w2_ref[...],
                 preferred_element_type=jnp.float32)
    h2 = jnp.maximum(h2 + b2_ref[...], 0.0)

    # fc3 (output padded to 128 lanes; padded bias columns are -1e30)
    logits = jnp.dot(h2.astype(jnp.bfloat16), w3_ref[...],
                     preferred_element_type=jnp.float32)
    logits = logits + b3_ref[...]

    # Numerically stable softmax over the feature axis; padded columns give
    # exp(-1e30 - m) == 0, so probabilities match the unpadded 4-way softmax.
    m = jnp.max(logits, axis=1, keepdims=True)
    e = jnp.exp(logits - m)
    denom = jnp.sum(e, axis=1, keepdims=True)
    o_ref[...] = (e * pl.reciprocal(denom, approx=True)).astype(o_ref.dtype)


def _round_up(v, m):
    return ((v + m - 1) // m) * m


@functools.partial(jax.jit, static_argnames=("tile_b",))
def emotion_predictor(x, w1, b1, w2, b2, w3, b3, tile_b=1024):
    """Fused forward pass. x: (B, 8) float32 -> (B, 4) float32 probabilities."""
    B, F = x.shape
    n_cls = w3.shape[1]

    # Batch tile: multiple of 8 sublanes; zero-pad batch to a tile multiple and
    # slice the padded rows off at the end (padded rows stay finite: x=0 rows
    # produce ordinary softmax outputs, then are discarded).
    tb = _round_up(min(tile_b, _round_up(B, 8)), 8)
    B_pad = _round_up(B, tb)
    x_p = jnp.pad(x, ((0, B_pad - B), (0, 0)))

    # Parameter prep: bf16 matmul inputs, f32 biases, lane-dense fc3.
    w1b = w1.astype(jnp.bfloat16)
    w2b = w2.astype(jnp.bfloat16)
    w3b = jnp.pad(w3, ((0, 0), (0, _PAD_N - n_cls))).astype(jnp.bfloat16)
    b1f = b1.astype(jnp.float32)
    b2f = b2.astype(jnp.float32)
    b3p = jnp.pad(b3.astype(jnp.float32), ((0, 0), (0, _PAD_N - n_cls)),
                  constant_values=_NEG_BIG)

    def resident(shape):
        # Weight/bias blocks stay pinned to block (0, 0) across the whole grid
        # -> DMA'd into VMEM once and kept resident across batch tiles.
        return pl.BlockSpec(shape, lambda i: (0,) * len(shape))

    out = pl.pallas_call(
        _emotion_kernel,
        out_shape=jax.ShapeDtypeStruct((B_pad, _PAD_N), jnp.float32),
        grid_spec=pltpu.PrefetchScalarGridSpec(
            num_scalar_prefetch=0,
            grid=(B_pad // tb,),
            in_specs=[
                pl.BlockSpec((tb, F), lambda i: (i, 0)),
                resident(w1b.shape), resident(b1f.shape),
                resident(w2b.shape), resident(b2f.shape),
                resident(w3b.shape), resident(b3p.shape),
            ],
            out_specs=pl.BlockSpec((tb, _PAD_N), lambda i: (i, 0)),
        ),
        compiler_params=pltpu.CompilerParams(
            dimension_semantics=("parallel",)),
    )(x_p, w1b, b1f, w2b, b2f, w3b, b3p)

    return out[:B, :n_cls]


def init_params(key):
    """Deterministic synthetic parameters with PyTorch nn.Linear shapes
    (stored transposed as (in, out)), biases as (1, out) rows."""
    ks = jax.random.split(key, 6)

    def linear(kw, kb, fan_in, fan_out):
        bound = 1.0 / jnp.sqrt(fan_in)
        w = jax.random.uniform(kw, (fan_in, fan_out), jnp.float32, -bound, bound)
        b = jax.random.uniform(kb, (1, fan_out), jnp.float32, -bound, bound)
        return w, b

    w1, b1 = linear(ks[0], ks[1], 8, 256)
    w2, b2 = linear(ks[2], ks[3], 256, 128)
    w3, b3 = linear(ks[4], ks[5], 128, 4)
    return w1, b1, w2, b2, w3, b3


def _reference(x, w1, b1, w2, b2, w3, b3):
    h1 = jnp.maximum(x @ w1 + b1, 0.0)
    h2 = jnp.maximum(h1 @ w2 + b2, 0.0)
    return jax.nn.softmax(h2 @ w3 + b3, axis=1)


if __name__ == "__main__":
    key = jax.random.PRNGKey(0)
    k_x, k_p = jax.random.split(key)

    B = 8  # small batch, multiple of 8 sublanes
    x = jax.random.normal(k_x, (B, 8), jnp.float32)
    params = init_params(k_p)

    out = emotion_predictor(x, *params)
    out = jax.block_until_ready(out)

    assert out.shape == (B, 4)
    # rows of a softmax sum to 1 (loose tol: approx reciprocal + bf16 matmuls)
    assert jnp.allclose(jnp.sum(out, axis=1), 1.0, atol=1e-2)
    # match pure-JAX f32 reference within bf16-matmul tolerance
    ref = _reference(x, *params)
    assert jnp.allclose(out, ref, atol=2e-2), float(jnp.max(jnp.abs(out - ref)))

    print("KERNEL_OK")
</pallas_src>

<mosaic_0001>
module attributes {stable_mosaic.version = 11 : i64} {
  func.func @_emotion_kernel(%arg0: i32, %arg1: memref<8x8xf32, #tpu.memory_space<vmem>>, %arg2: memref<8x256xbf16, #tpu.memory_space<vmem>>, %arg3: memref<1x256xf32, #tpu.memory_space<vmem>>, %arg4: memref<256x128xbf16, #tpu.memory_space<vmem>>, %arg5: memref<1x128xf32, #tpu.memory_space<vmem>>, %arg6: memref<128x128xbf16, #tpu.memory_space<vmem>>, %arg7: memref<1x128xf32, #tpu.memory_space<vmem>>, %arg8: memref<8x128xf32, #tpu.memory_space<vmem>>) attributes {dimension_semantics = [#tpu.dimension_semantics<parallel>], iteration_bounds = array<i64: 1>, scalar_prefetch = 0 : i64, scratch_operands = 0 : i64, tpu.core_type = #tpu.core_type<tc>, window_params = [{transform_indices = @transform_0, window_bounds = array<i64: 8, 8>}, {pipeline_mode = #tpu.pipeline_mode<synchronous>, transform_indices = @transform_1, window_bounds = array<i64: 8, 256>}, {pipeline_mode = #tpu.pipeline_mode<synchronous>, transform_indices = @transform_2, window_bounds = array<i64: 1, 256>}, {pipeline_mode = #tpu.pipeline_mode<synchronous>, transform_indices = @transform_3, window_bounds = array<i64: 256, 128>}, {pipeline_mode = #tpu.pipeline_mode<synchronous>, transform_indices = @transform_4, window_bounds = array<i64: 1, 128>}, {pipeline_mode = #tpu.pipeline_mode<synchronous>, transform_indices = @transform_5, window_bounds = array<i64: 128, 128>}, {pipeline_mode = #tpu.pipeline_mode<synchronous>, transform_indices = @transform_6, window_bounds = array<i64: 1, 128>}, {transform_indices = @transform_7, window_bounds = array<i64: 8, 128>}]} {
    %c0 = arith.constant 0 : index
    %c0_0 = arith.constant 0 : index
    %0 = vector.load %arg1[%c0, %c0_0] : memref<8x8xf32, #tpu.memory_space<vmem>>, vector<8x8xf32>
    %1 = arith.truncf %0 : vector<8x8xf32> to vector<8x8xbf16>
    %c0_1 = arith.constant 0 : index
    %c0_2 = arith.constant 0 : index
    %2 = vector.load %arg2[%c0_1, %c0_2] : memref<8x256xbf16, #tpu.memory_space<vmem>>, vector<8x256xbf16>
    %cst = arith.constant dense<0.000000e+00> : vector<8x256xf32>
    %3 = tpu.matmul %1, %2, %cst {dimension_numbers = #tpu.dot_dimension_numbers<[1], [0], [0], [1], [0, 0, 1, 1], [], []>} : vector<8x8xbf16>, vector<8x256xbf16>, vector<8x256xf32> -> vector<8x256xf32>
    %c0_3 = arith.constant 0 : index
    %c0_4 = arith.constant 0 : index
    %4 = vector.load %arg3[%c0_3, %c0_4] : memref<1x256xf32, #tpu.memory_space<vmem>>, vector<1x256xf32>
    %5 = vector.broadcast %4 : vector<1x256xf32> to vector<8x256xf32>
    %6 = arith.addf %3, %5 : vector<8x256xf32>
    %cst_5 = arith.constant 0.000000e+00 : f32
    %7 = vector.broadcast %cst_5 : f32 to vector<8x256xf32>
    %8 = arith.maximumf %6, %7 : vector<8x256xf32>
    %9 = arith.truncf %8 : vector<8x256xf32> to vector<8x256xbf16>
    %c0_6 = arith.constant 0 : index
    %c0_7 = arith.constant 0 : index
    %10 = vector.load %arg4[%c0_6, %c0_7] : memref<256x128xbf16, #tpu.memory_space<vmem>>, vector<256x128xbf16>
    %cst_8 = arith.constant dense<0.000000e+00> : vector<8x128xf32>
    %11 = tpu.matmul %9, %10, %cst_8 {dimension_numbers = #tpu.dot_dimension_numbers<[1], [0], [0], [1], [0, 0, 1, 1], [], []>} : vector<8x256xbf16>, vector<256x128xbf16>, vector<8x128xf32> -> vector<8x128xf32>
    %c0_9 = arith.constant 0 : index
    %c0_10 = arith.constant 0 : index
    %12 = vector.load %arg5[%c0_9, %c0_10] : memref<1x128xf32, #tpu.memory_space<vmem>>, vector<1x128xf32>
    %13 = vector.broadcast %12 : vector<1x128xf32> to vector<8x128xf32>
    %14 = arith.addf %11, %13 : vector<8x128xf32>
    %cst_11 = arith.constant 0.000000e+00 : f32
    %15 = vector.broadcast %cst_11 : f32 to vector<8x128xf32>
    %16 = arith.maximumf %14, %15 : vector<8x128xf32>
    %17 = arith.truncf %16 : vector<8x128xf32> to vector<8x128xbf16>
    %c0_12 = arith.constant 0 : index
    %c0_13 = arith.constant 0 : index
    %18 = vector.load %arg6[%c0_12, %c0_13] : memref<128x128xbf16, #tpu.memory_space<vmem>>, vector<128x128xbf16>
    %cst_14 = arith.constant dense<0.000000e+00> : vector<8x128xf32>
    %19 = tpu.matmul %17, %18, %cst_14 {dimension_numbers = #tpu.dot_dimension_numbers<[1], [0], [0], [1], [0, 0, 1, 1], [], []>} : vector<8x128xbf16>, vector<128x128xbf16>, vector<8x128xf32> -> vector<8x128xf32>
    %c0_15 = arith.constant 0 : index
    %c0_16 = arith.constant 0 : index
    %20 = vector.load %arg7[%c0_15, %c0_16] : memref<1x128xf32, #tpu.memory_space<vmem>>, vector<1x128xf32>
    %21 = vector.broadcast %20 : vector<1x128xf32> to vector<8x128xf32>
    %22 = arith.addf %19, %21 : vector<8x128xf32>
    %cst_17 = arith.constant dense<0xFF800000> : vector<8xf32>
    %23 = vector.multi_reduction <maximumf>, %22, %cst_17 [1] : vector<8x128xf32> to vector<8xf32>
    %24 = vector.shape_cast %23 : vector<8xf32> to vector<8x1xf32>
    %25 = vector.broadcast %24 : vector<8x1xf32> to vector<8x128xf32>
    %26 = arith.subf %22, %25 : vector<8x128xf32>
    %27 = math.exp %26 : vector<8x128xf32>
    %cst_18 = arith.constant dense<0.000000e+00> : vector<8xf32>
    %28 = vector.multi_reduction <add>, %27, %cst_18 [1] : vector<8x128xf32> to vector<8xf32>
    %29 = vector.shape_cast %28 : vector<8xf32> to vector<8x1xf32>
    %30 = tpu.reciprocal %29 {approx = true} : vector<8x1xf32> -> vector<8x1xf32>
    %31 = vector.broadcast %30 : vector<8x1xf32> to vector<8x128xf32>
    %32 = arith.mulf %27, %31 : vector<8x128xf32>
    %c0_19 = arith.constant 0 : index
    %c0_20 = arith.constant 0 : index
    %33 = vector.load %arg8[%c0_19, %c0_20] : memref<8x128xf32, #tpu.memory_space<vmem>>, vector<8x128xf32>
    tpu.vector_store %arg8[%c0_19, %c0_20], %32 {strides = array<i32>} : memref<8x128xf32, #tpu.memory_space<vmem>>, vector<8x128xf32>,
    return
  }
  func.func @transform_0(%arg0: i32) -> (i32, i32) {
    %c0_i32 = arith.constant 0 : i32
    %c0_i32_0 = arith.constant 0 : i32
    return %arg0, %c0_i32 : i32, i32
  }
  func.func @transform_1(%arg0: i32) -> (i32, i32) {
    %c0_i32 = arith.constant 0 : i32
    %c0_i32_0 = arith.constant 0 : i32
    %c0_i32_1 = arith.constant 0 : i32
    return %c0_i32, %c0_i32_0 : i32, i32
  }
  func.func @transform_2(%arg0: i32) -> (i32, i32) {
    %c0_i32 = arith.constant 0 : i32
    %c0_i32_0 = arith.constant 0 : i32
    %c0_i32_1 = arith.constant 0 : i32
    return %c0_i32, %c0_i32_0 : i32, i32
  }
  func.func @transform_3(%arg0: i32) -> (i32, i32) {
    %c0_i32 = arith.constant 0 : i32
    %c0_i32_0 = arith.constant 0 : i32
    %c0_i32_1 = arith.constant 0 : i32
    return %c0_i32, %c0_i32_0 : i32, i32
  }
  func.func @transform_4(%arg0: i32) -> (i32, i32) {
    %c0_i32 = arith.constant 0 : i32
    %c0_i32_0 = arith.constant 0 : i32
    %c0_i32_1 = arith.constant 0 : i32
    return %c0_i32, %c0_i32_0 : i32, i32
  }
  func.func @transform_5(%arg0: i32) -> (i32, i32) {
    %c0_i32 = arith.constant 0 : i32
    %c0_i32_0 = arith.constant 0 : i32
    %c0_i32_1 = arith.constant 0 : i32
    return %c0_i32, %c0_i32_0 : i32, i32
  }
  func.func @transform_6(%arg0: i32) -> (i32, i32) {
    %c0_i32 = arith.constant 0 : i32
    %c0_i32_0 = arith.constant 0 : i32
    %c0_i32_1 = arith.constant 0 : i32
    return %c0_i32, %c0_i32_0 : i32, i32
  }
  func.func @transform_7(%arg0: i32) -> (i32, i32) {
    %c0_i32 = arith.constant 0 : i32
    %c0_i32_0 = arith.constant 0 : i32
    return %arg0, %c0_i32 : i32, i32
  }
}

</mosaic_0001>

<llo_original>
// kernel: emotion_predictor.1
$region0: #{emotion_predictor.1}
  #allocation0 [shape = 'u32[]', space=smem, size = 0x4, offset = 0x4, fixed_abs, tag = 'smem constant byte address 0x4 - core index']
  #allocation1 [shape = 'u32[144,128]{1,0:T(1,128)}', space=vmem, size = 0x12000, scoped, tag = 'internal scratch']
  %s0 = inlined_call_operand.vmem [shape: f32[8,8], index: 0, kind: input, shape index: {}]
  %s1 = inlined_call_operand.vmem [shape: bf16[8,256], index: 1, kind: input, shape index: {}]
  %s2 = inlined_call_operand.vmem [shape: f32[1,256], index: 2, kind: input, shape index: {}]
  %s3 = inlined_call_operand.vmem [shape: bf16[256,128], index: 3, kind: input, shape index: {}]
  %s4 = inlined_call_operand.vmem [shape: f32[1,128], index: 4, kind: input, shape index: {}]
  %s5 = inlined_call_operand.vmem [shape: bf16[128,128], index: 5, kind: input, shape index: {}]
  %s6 = inlined_call_operand.vmem [shape: f32[1,128], index: 6, kind: input, shape index: {}]
  %s7 = inlined_call_operand.vmem [shape: f32[8,128], index: 7, kind: output, shape index: {}]
  %s8 = sld [smem:[#allocation0]]
  $region38: #{emotion_predictor.1} parent=0
    _
  %s10 = ssub.s32 1, %s8
  %s11 = scalar_select 0, %s10, %s8
  // Predicated region
  $region2: #{emotion_predictor.1} parent=0 // pred_check
    _
  $region3: #{emotion_predictor.1} parent=0 // pred_check_branch
    %13 = sbr.rel (0) target = $region5
  $region4: #{emotion_predictor.1} parent=0 // pred_region
    _
  $region5: #{emotion_predictor.1} parent=0 // pred_fallthru
    _
  // Predicated region
  $region6: #{emotion_predictor.1} parent=0 // pred_check
    _
  $region7: #{emotion_predictor.1} parent=0 // pred_check_branch
    %15 = sbr.rel (0) target = $region9
  $region8: #{emotion_predictor.1} parent=0 // pred_region
    _
  $region9: #{emotion_predictor.1} parent=0 // pred_fallthru
    _
  // Predicated region
  $region10: #{emotion_predictor.1} parent=0 // pred_check
    _
  $region11: #{emotion_predictor.1} parent=0 // pred_check_branch
    %17 = sbr.rel (0) target = $region13
  $region12: #{emotion_predictor.1} parent=0 // pred_region
    _
  $region13: #{emotion_predictor.1} parent=0 // pred_fallthru
    _
  // Predicated region
  $region14: #{emotion_predictor.1} parent=0 // pred_check
    _
  $region15: #{emotion_predictor.1} parent=0 // pred_check_branch
    %19 = sbr.rel (0) target = $region17
  $region16: #{emotion_predictor.1} parent=0 // pred_region
    _
  $region17: #{emotion_predictor.1} parent=0 // pred_fallthru
    _
  // Predicated region
  $region18: #{emotion_predictor.1} parent=0 // pred_check
    _
  $region19: #{emotion_predictor.1} parent=0 // pred_check_branch
    %21 = sbr.rel (0) target = $region21
  $region20: #{emotion_predictor.1} parent=0 // pred_region
    _
  $region21: #{emotion_predictor.1} parent=0 // pred_fallthru
    _
  // Predicated region
  $region22: #{emotion_predictor.1} parent=0 // pred_check
    _
  $region23: #{emotion_predictor.1} parent=0 // pred_check_branch
    %23 = sbr.rel (0) target = $region25
  $region24: #{emotion_predictor.1} parent=0 // pred_region
    _
  $region25: #{emotion_predictor.1} parent=0 // pred_fallthru
    _
  // Predicated region
  $region26: #{emotion_predictor.1} parent=0 // pred_check
    _
  $region27: #{emotion_predictor.1} parent=0 // pred_check_branch
    %25 = sbr.rel (0) target = $region29
  $region28: #{emotion_predictor.1} parent=0 // pred_region
    _
  $region29: #{emotion_predictor.1} parent=0 // pred_fallthru
    _
  %v27 = vld [vmem:[%s0] sm:$0xff]
  %v28 = vpack.c.bf16 %v27, %v27
  %v29 = vld [vmem:[%s1] sm:$0xff]
  %v30 = vld [vmem:[%s2] sm:$0x3]
  %v32 = vlaneseq
  %v33 = vshrl.u32 %v32, 7
  %v34 = vsub.s32 0, %v33
  %v35 = vrot.slane %v30, %v34
  %v36 = vlaneseq
  %v37 = vshrl.u32 %v36, 7
  %v38 = vsub.s32 1, %v37
  %v39 = vrot.slane %v30, %v38
  %v43 = vunpack.c.l.b16 %v29
  %v44 = vunpack.c.h.b16 %v29
  %v45 = vpack.c.b16 %v43, %v43
  %v46 = vpack.c.b16 %v44, %v44
  %vm47 = vcmask 64512
  %v49 = vsel %vm47, %v28, 0
  %vm51 = vcmask 1043456
  %v53 = vsel %vm51, %v45, 0
  %v56 = vsel %vm51, %v46, 0
  %58 = vmatprep.subr.bf16.mxu0 %v56
  %59 = vmatpush1.bf16.msra.mxu0 %v53
  %60 = vmatprep.subr.bf16.mxu0 0
  %61 = vmatpush1.bf16.msra.mxu0 0
  %62 = vmatprep.subr.bf16.mxu0 0
  %63 = vmatpush1.bf16.msra.mxu0 0
  %64 = vmatprep.subr.bf16.mxu0 0
  %65 = vmatpush1.bf16.msra.mxu0 0
  %66 = vmatprep.subr.bf16.mxu0 0
  %67 = vmatpush1.bf16.msra.mxu0 0
  %68 = vmatprep.subr.bf16.mxu0 0
  %69 = vmatpush1.bf16.msra.mxu0 0
  %70 = vmatprep.subr.bf16.mxu0 0
  %71 = vmatpush1.bf16.msra.mxu0 0
  %72 = vmatprep.subr.bf16.mxu0 0
  %73 = vmatpush1.bf16.msra.mxu0 0
  %74 = vmatprep.subr.bf16.mxu0 0
  %75 = vmatpush1.bf16.msra.mxu0 0
  %76 = vmatprep.subr.bf16.mxu0 0
  %77 = vmatpush1.bf16.msra.mxu0 0
  %78 = vmatprep.subr.bf16.mxu0 0
  %79 = vmatpush1.bf16.msra.mxu0 0
  %80 = vmatprep.subr.bf16.mxu0 0
  %81 = vmatpush1.bf16.msra.mxu0 0
  %82 = vmatprep.subr.bf16.mxu0 0
  %83 = vmatpush1.bf16.msra.mxu0 0
  %84 = vmatprep.subr.bf16.mxu0 0
  %85 = vmatpush1.bf16.msra.mxu0 0
  %86 = vmatprep.subr.bf16.mxu0 0
  %87 = vmatpush1.bf16.msra.mxu0 0
  %88 = vmatprep.subr.bf16.mxu0 0
  %89 = vmatpush1.bf16.msra.mxu0 0
  %90 = vmatprep.mubr.bf16.mxu0 0
  %91 = vmatmul.mubr.bf16.gmra.mrb[0].mxu0 %v49
  %v92 = vpop.f32.mrb[0].mxu0
  %v93 = vadd.f32 %v35, %v92
  %v94 = vpop.f32.mrb[0].mxu0
  %v95 = vadd.f32 %v39, %v94
  %v96 = vpop.f32.mrb[0].mxu0
  %v97 = vpop.f32.mrb[0].mxu0
  %98 = vdwg.mxu0
  %v99 = vmax.f32 %v93, 0.0
  %v100 = vmax.f32 %v95, 0.0
  %v101 = vpack.c.bf16 %v99, %v99
  %v102 = vpack.c.bf16 %v100, %v100
  %v103 = vld [vmem:[%s3] sm:$0xf]
  %v104 = vld [vmem:[%s3 + $0x4] sm:$0xf]
  %v105 = vld [vmem:[%s3 + $0x8] sm:$0xf]
  %v106 = vld [vmem:[%s3 + $0xc] sm:$0xf]
  %v107 = vld [vmem:[%s3 + $0x10] sm:$0xf]
  %v108 = vld [vmem:[%s3 + $0x14] sm:$0xf]
  %v109 = vld [vmem:[%s3 + $0x18] sm:$0xf]
  %v110 = vld [vmem:[%s3 + $0x1c] sm:$0xf]
  %v111 = vld [vmem:[%s3 + $0x20] sm:$0xf]
  %v112 = vld [vmem:[%s3 + $0x24] sm:$0xf]
  %v113 = vld [vmem:[%s3 + $0x28] sm:$0xf]
  %v114 = vld [vmem:[%s3 + $0x2c] sm:$0xf]
  %v115 = vld [vmem:[%s3 + $0x30] sm:$0xf]
  %v116 = vld [vmem:[%s3 + $0x34] sm:$0xf]
  %v117 = vld [vmem:[%s3 + $0x38] sm:$0xf]
  %v118 = vld [vmem:[%s3 + $0x3c] sm:$0xf]
  %v119 = vld [vmem:[%s3 + $0x40] sm:$0xf]
  %v120 = vld [vmem:[%s3 + $0x44] sm:$0xf]
  %v121 = vld [vmem:[%s3 + $0x48] sm:$0xf]
  %v122 = vld [vmem:[%s3 + $0x4c] sm:$0xf]
  %v123 = vld [vmem:[%s3 + $0x50] sm:$0xf]
  %v124 = vld [vmem:[%s3 + $0x54] sm:$0xf]
  %v125 = vld [vmem:[%s3 + $0x58] sm:$0xf]
  %v126 = vld [vmem:[%s3 + $0x5c] sm:$0xf]
  %v127 = vld [vmem:[%s3 + $0x60] sm:$0xf]
  %v128 = vld [vmem:[%s3 + $0x64] sm:$0xf]
  %v129 = vld [vmem:[%s3 + $0x68] sm:$0xf]
  %v130 = vld [vmem:[%s3 + $0x6c] sm:$0xf]
  %v131 = vld [vmem:[%s3 + $0x70] sm:$0xf]
  %v132 = vld [vmem:[%s3 + $0x74] sm:$0xf]
  %v133 = vld [vmem:[%s3 + $0x78] sm:$0xf]
  %v134 = vld [vmem:[%s3 + $0x7c] sm:$0xf]
  %v135 = vld [vmem:[%s4] sm:$0x1]
  %v137 = vlaneseq
  %v138 = vshrl.u32 %v137, 7
  %v139 = vsub.s32 0, %v138
  %v140 = vrot.slane %v135, %v139
  %v174 = vunpack.c.l.b16 %v103
  %v175 = vunpack.c.l.b16 %v104
  %v176 = vunpack.c.l.b16 %v105
  %v177 = vunpack.c.l.b16 %v106
  %v178 = vunpack.c.l.b16 %v107
  %v179 = vunpack.c.l.b16 %v108
  %v180 = vunpack.c.l.b16 %v109
  %v181 = vunpack.c.l.b16 %v110
  %v182 = vunpack.c.l.b16 %v111
  %v183 = vunpack.c.l.b16 %v112
  %v184 = vunpack.c.l.b16 %v113
  %v185 = vunpack.c.l.b16 %v114
  %v186 = vunpack.c.l.b16 %v115
  %v187 = vunpack.c.l.b16 %v116
  %v188 = vunpack.c.l.b16 %v117
  %v189 = vunpack.c.l.b16 %v118
  %v190 = vunpack.c.l.b16 %v119
  %v191 = vunpack.c.l.b16 %v120
  %v192 = vunpack.c.l.b16 %v121
  %v193 = vunpack.c.l.b16 %v122
  %v194 = vunpack.c.l.b16 %v123
  %v195 = vunpack.c.l.b16 %v124
  %v196 = vunpack.c.l.b16 %v125
  %v197 = vunpack.c.l.b16 %v126
  %v198 = vunpack.c.l.b16 %v127
  %v199 = vunpack.c.l.b16 %v128
  %v200 = vunpack.c.l.b16 %v129
  %v201 = vunpack.c.l.b16 %v130
  %v202 = vunpack.c.l.b16 %v131
  %v203 = vunpack.c.l.b16 %v132
  %v204 = vunpack.c.l.b16 %v133
  %v205 = vunpack.c.l.b16 %v134
  %v206 = vpack.c.b16 %v175, %v174
  %v207 = vpack.c.b16 %v177, %v176
  %v208 = vpack.c.b16 %v179, %v178
  %v209 = vpack.c.b16 %v181, %v180
  %v210 = vpack.c.b16 %v183, %v182
  %v211 = vpack.c.b16 %v185, %v184
  %v212 = vpack.c.b16 %v187, %v186
  %v213 = vpack.c.b16 %v189, %v188
  %v214 = vpack.c.b16 %v191, %v190
  %v215 = vpack.c.b16 %v193, %v192
  %v216 = vpack.c.b16 %v195, %v194
  %v217 = vpack.c.b16 %v197, %v196
  %v218 = vpack.c.b16 %v199, %v198
  %v219 = vpack.c.b16 %v201, %v200
  %v220 = vpack.c.b16 %v203, %v202
  %v221 = vpack.c.b16 %v205, %v204
  %238 = vmatprep.subr.bf16.mxu0 0
  %239 = vmatpush1.bf16.msra.mxu0 %v206
  %240 = vmatprep.subr.bf16.mxu0 0
  %241 = vmatpush1.bf16.msra.mxu0 %v207
  %242 = vmatprep.subr.bf16.mxu0 0
  %243 = vmatpush1.bf16.msra.mxu0 %v208
  %244 = vmatprep.subr.bf16.mxu0 0
  %245 = vmatpush1.bf16.msra.mxu0 %v209
  %246 = vmatprep.subr.bf16.mxu0 0
  %247 = vmatpush1.bf16.msra.mxu0 %v210
  %248 = vmatprep.subr.bf16.mxu0 0
  %249 = vmatpush1.bf16.msra.mxu0 %v211
  %250 = vmatprep.subr.bf16.mxu0 0
  %251 = vmatpush1.bf16.msra.mxu0 %v212
  %252 = vmatprep.subr.bf16.mxu0 0
  %253 = vmatpush1.bf16.msra.mxu0 %v213
  %254 = vmatprep.subr.bf16.mxu0 0
  %255 = vmatpush1.bf16.msra.mxu0 %v214
  %256 = vmatprep.subr.bf16.mxu0 0
  %257 = vmatpush1.bf16.msra.mxu0 %v215
  %258 = vmatprep.subr.bf16.mxu0 0
  %259 = vmatpush1.bf16.msra.mxu0 %v216
  %260 = vmatprep.subr.bf16.mxu0 0
  %261 = vmatpush1.bf16.msra.mxu0 %v217
  %262 = vmatprep.subr.bf16.mxu0 0
  %263 = vmatpush1.bf16.msra.mxu0 %v218
  %264 = vmatprep.subr.bf16.mxu0 0
  %265 = vmatpush1.bf16.msra.mxu0 %v219
  %266 = vmatprep.subr.bf16.mxu0 0
  %267 = vmatpush1.bf16.msra.mxu0 %v220
  %268 = vmatprep.subr.bf16.mxu0 0
  %269 = vmatpush1.bf16.msra.mxu0 %v221
  %270 = vmatprep.mubr.bf16.mxu0 %v102
  %271 = vmatmul.mubr.bf16.gmra.mrb[0].mxu0 %v101
  %v272 = vpop.f32.mrb[0].mxu0
  %v273 = vadd.f32 %v140, %v272
  %v274 = vpop.f32.mrb[0].mxu0
  %v275 = vpop.f32.mrb[0].mxu0
  %v276 = vpop.f32.mrb[0].mxu0
  %277 = vdwg.mxu0
  %v278 = vmax.f32 %v273, 0.0
  %v279 = vpack.c.bf16 %v278, %v278
  %v280 = vld [vmem:[%s5] sm:$0xf]
  %v281 = vld [vmem:[%s5 + $0x4] sm:$0xf]
  %v282 = vld [vmem:[%s5 + $0x8] sm:$0xf]
  %v283 = vld [vmem:[%s5 + $0xc] sm:$0xf]
  %v284 = vld [vmem:[%s5 + $0x10] sm:$0xf]
  %v285 = vld [vmem:[%s5 + $0x14] sm:$0xf]
  %v286 = vld [vmem:[%s5 + $0x18] sm:$0xf]
  %v287 = vld [vmem:[%s5 + $0x1c] sm:$0xf]
  %v288 = vld [vmem:[%s5 + $0x20] sm:$0xf]
  %v289 = vld [vmem:[%s5 + $0x24] sm:$0xf]
  %v290 = vld [vmem:[%s5 + $0x28] sm:$0xf]
  %v291 = vld [vmem:[%s5 + $0x2c] sm:$0xf]
  %v292 = vld [vmem:[%s5 + $0x30] sm:$0xf]
  %v293 = vld [vmem:[%s5 + $0x34] sm:$0xf]
  %v294 = vld [vmem:[%s5 + $0x38] sm:$0xf]
  %v295 = vld [vmem:[%s5 + $0x3c] sm:$0xf]
  %v296 = vld [vmem:[%s6] sm:$0x1]
  %v298 = vlaneseq
  %v299 = vshrl.u32 %v298, 7
  %v300 = vsub.s32 0, %v299
  %v301 = vrot.slane %v296, %v300
  %v319 = vunpack.c.l.b16 %v280
  %v320 = vunpack.c.l.b16 %v281
  %v321 = vunpack.c.l.b16 %v282
  %v322 = vunpack.c.l.b16 %v283
  %v323 = vunpack.c.l.b16 %v284
  %v324 = vunpack.c.l.b16 %v285
  %v325 = vunpack.c.l.b16 %v286
  %v326 = vunpack.c.l.b16 %v287
  %v327 = vunpack.c.l.b16 %v288
  %v328 = vunpack.c.l.b16 %v289
  %v329 = vunpack.c.l.b16 %v290
  %v330 = vunpack.c.l.b16 %v291
  %v331 = vunpack.c.l.b16 %v292
  %v332 = vunpack.c.l.b16 %v293
  %v333 = vunpack.c.l.b16 %v294
  %v334 = vunpack.c.l.b16 %v295
  %v335 = vpack.c.b16 %v320, %v319
  %v336 = vpack.c.b16 %v322, %v321
  %v337 = vpack.c.b16 %v324, %v323
  %v338 = vpack.c.b16 %v326, %v325
  %v339 = vpack.c.b16 %v328, %v327
  %v340 = vpack.c.b16 %v330, %v329
  %v341 = vpack.c.b16 %v332, %v331
  %v342 = vpack.c.b16 %v334, %v333
  %351 = vmatprep.subr.bf16.mxu0 0
  %352 = vmatpush1.bf16.msra.mxu0 %v335
  %353 = vmatprep.subr.bf16.mxu0 0
  %354 = vmatpush1.bf16.msra.mxu0 %v336
  %355 = vmatprep.subr.bf16.mxu0 0
  %356 = vmatpush1.bf16.msra.mxu0 %v337
  %357 = vmatprep.subr.bf16.mxu0 0
  %358 = vmatpush1.bf16.msra.mxu0 %v338
  %359 = vmatprep.subr.bf16.mxu0 0
  %360 = vmatpush1.bf16.msra.mxu0 %v339
  %361 = vmatprep.subr.bf16.mxu0 0
  %362 = vmatpush1.bf16.msra.mxu0 %v340
  %363 = vmatprep.subr.bf16.mxu0 0
  %364 = vmatpush1.bf16.msra.mxu0 %v341
  %365 = vmatprep.subr.bf16.mxu0 0
  %366 = vmatpush1.bf16.msra.mxu0 %v342
  %367 = vmatprep.subr.bf16.mxu0 0
  %368 = vmatpush1.bf16.msra.mxu0 0
  %369 = vmatprep.subr.bf16.mxu0 0
  %370 = vmatpush1.bf16.msra.mxu0 0
  %371 = vmatprep.subr.bf16.mxu0 0
  %372 = vmatpush1.bf16.msra.mxu0 0
  %373 = vmatprep.subr.bf16.mxu0 0
  %374 = vmatpush1.bf16.msra.mxu0 0
  %375 = vmatprep.subr.bf16.mxu0 0
  %376 = vmatpush1.bf16.msra.mxu0 0
  %377 = vmatprep.subr.bf16.mxu0 0
  %378 = vmatpush1.bf16.msra.mxu0 0
  %379 = vmatprep.subr.bf16.mxu0 0
  %380 = vmatpush1.bf16.msra.mxu0 0
  %381 = vmatprep.subr.bf16.mxu0 0
  %382 = vmatpush1.bf16.msra.mxu0 0
  %383 = vmatprep.mubr.bf16.mxu0 0
  %384 = vmatmul.mubr.bf16.gmra.mrb[0].mxu0 %v279
  %v385 = vpop.f32.mrb[0].mxu0
  %v386 = vadd.f32 %v301, %v385
  %v387 = vpop.f32.mrb[0].mxu0
  %v388 = vpop.f32.mrb[0].mxu0
  %v389 = vpop.f32.mrb[0].mxu0
  %390 = vdwg.mxu0
  %391 = vmax.xlane.f32.xlu0 %v386
  %v392 = vpop.xlane.xlu0 %391
  %v393 = vsub.f32 %v386, %v392
  %v394 = vmul.f32 %v393, 1.442695
  %v395 = vpow.pop %v394
  %396 = vadd.xlane.f32.xlu0 %v395
  %v397 = vpop.xlane.xlu0 %396
  %v398 = vrcp.pop %v397
  %v399 = vmul.f32 %v395, %v398
  %400 = vst [vmem:[%s7] sm:$0xff] %v399
  // Predicated region
  $region30: #{emotion_predictor.1} parent=0 // pred_check
    _
  $region31: #{emotion_predictor.1} parent=0 // pred_check_branch
    %402 = sbr.rel (0) target = $region33
  $region32: #{emotion_predictor.1} parent=0 // pred_region
    _
  $region33: #{emotion_predictor.1} parent=0 // pred_fallthru
    _
  // Predicated region
  $region34: #{emotion_predictor.1} parent=0 // pred_check
    _
  $region35: #{emotion_predictor.1} parent=0 // pred_check_branch
    %404 = sbr.rel (0) target = $region37
  $region36: #{emotion_predictor.1} parent=0 // pred_region
    _
  $region37: #{emotion_predictor.1} parent=0 // pred_fallthru
    _

</llo_original>
